<compile_context>
chip_gen: v7x
topology: tpu7x:2x2x1
jax: 0.10.0
libtpu: 0.0.40
codegen_flags: <defaults>
</compile_context>

<pallas_src>
import functools

import jax
import jax.numpy as jnp
import numpy as np
from jax.experimental import pallas as pl
from jax.experimental.pallas import tpu as pltpu

F32 = jnp.float32
BF16 = jnp.bfloat16


# ----------------------------- in-kernel helpers -----------------------------

def _softmax_last(x, *, approx=False):
    m = jnp.max(x, axis=-1, keepdims=True)
    e = jnp.exp(x - m)
    s = jnp.sum(e, axis=-1, keepdims=True)
    if approx:
        return e * pl.reciprocal(s, approx=True)   # divide goes to the EUP slot
    return e / s


def _vmem_limit_bytes():
    # Generation-aware scoped-VMEM request: ~96 MiB on v5e/v6e (128 MiB physical),
    # ~48 MiB on v7x (64 MiB physical).  Conservative fallback if the query is
    # unavailable in the running jax version.
    try:
        cap = pltpu.get_tpu_info().vmem_capacity_bytes
        return int(min(cap * 3 // 4, 100 * 1024 * 1024))
    except Exception:
        return 48 * 1024 * 1024


def _pick_tile_n(n, cap=1024):
    for t in (cap, 512, 256, 128):
        if n >= t and n % t == 0:
            return t
    # Single block over n (a block dim equal to the full array dim is always legal).
    # TODO(synk): add a masked / partial last tile for large n not divisible by 128.
    return n


# ------------------------------- Kernel A ------------------------------------
# per (batch, n_tile): one merged bf16 projection  x @ [Wv | Wqa | Wka]  then
#   - q-attention: softmax over the agent axis, streamed per head (bf16, lane-dense)
#   - k-attention: online softmax over n (the tiled axis), kv accumulated via
#     transpose-A matmuls into a (d, heads*agent) f32 scratch; written on last tile.

def _proj_attn_kernel(x_ref, w_ref, qa_ref, kv_ref, m_scr, l_scr, acc_scr,
                      *, heads, dim_head, agent_num):
    a = agent_num
    d = dim_head
    dim = heads * d
    ni = pl.program_id(1)

    @pl.when(ni == 0)
    def _():
        m_scr[...] = jnp.full_like(m_scr, -jnp.inf)
        l_scr[...] = jnp.zeros_like(l_scr)
        acc_scr[...] = jnp.zeros_like(acc_scr)

    x = x_ref[0]                                               # (tn, dim) bf16
    proj = jnp.dot(x, w_ref[...], preferred_element_type=F32)  # (tn, dim + 2*heads*a) f32

    v = proj[:, :dim]                           # (tn, heads*d)
    sq = proj[:, dim:dim + heads * a]           # folded q@agent^T * scale  (tn, heads*a)
    sk = proj[:, dim + heads * a:]              # folded k@agent^T          (tn, heads*a)

    # ---- q-attention: per-head softmax over the agent axis, streamed to qa_ref ----
    for h in range(heads):                      # heads is small & static -> unrolled
        lo = h * a
        qa_ref[0, :, lo:lo + a] = _softmax_last(sq[:, lo:lo + a], approx=True).astype(BF16)

    # ---- k-attention: online softmax over n (the reduction/tiled axis) ----
    m_old = m_scr[...]                                          # (1, heads*a)
    m_new = jnp.maximum(m_old, jnp.max(sk, axis=0, keepdims=True))
    alpha = jnp.exp(m_old - m_new)                              # (1, heads*a)
    p = jnp.exp(sk - m_new)                                     # (tn, heads*a)
    l_scr[...] = alpha * l_scr[...] + jnp.sum(p, axis=0, keepdims=True)
    m_scr[...] = m_new
    acc_scr[...] = acc_scr[...] * alpha                         # whole-slab rescale

    p_b = p.astype(BF16)
    v_b = v.astype(BF16)
    for h in range(heads):
        # (d, a) += v_h^T @ p_h : contraction over n for both operands (MXU-native).
        kvp = jax.lax.dot_general(
            v_b[:, h * d:(h + 1) * d], p_b[:, h * a:(h + 1) * a],
            (((0,), (0,)), ((), ())), preferred_element_type=F32)
        acc_scr[:, h * a:(h + 1) * a] = acc_scr[:, h * a:(h + 1) * a] + kvp

    @pl.when(ni == pl.num_programs(1) - 1)
    def _():
        # exact divide: kv feeds the hard threshold / mask comparisons downstream.
        kv_ref[0] = acc_scr[...] / l_scr[...]                   # (d, heads*a) f32


# ------------------------------- Kernel C ------------------------------------
# per (batch, n_tile): out[:, h*d:(h+1)*d] = q_attn_h @ kv2_h, written directly in the
# final lane-dense (b, n, heads*d) layout (bf16).  Pure matmul -> both axes parallel.

def _out_kernel(qa_ref, kv2_ref, out_ref, *, heads, dim_head, agent_num):
    a = agent_num
    d = dim_head
    qa = qa_ref[0]                                              # (tn, heads*a) bf16
    for h in range(heads):
        out_ref[0, :, h * d:(h + 1) * d] = jnp.dot(
            qa[:, h * a:(h + 1) * a], kv2_ref[0, h],
            preferred_element_type=F32).astype(out_ref.dtype)


# ------------------------------- wrapper --------------------------------------

def amd_layer_forward(x, params, *, heads, agent_num, return_WSI_attn=False):
    b, n, dim = x.shape
    d = dim // heads
    a = agent_num
    scale = float(d) ** -0.5
    vmem_limit = _vmem_limit_bytes()

    # ---- host-side weight prep (fold q/k agent matmuls into the projection) ----
    w_qkv_t = params["to_qkv_w"].T.astype(F32)                  # (dim, 3*dim): qkv = x @ w
    wq_t = w_qkv_t[:, :dim].reshape(dim, heads, d)
    wk_t = w_qkv_t[:, dim:2 * dim].reshape(dim, heads, d)
    wv_t = w_qkv_t[:, 2 * dim:]
    agent = params["agent"].astype(F32)                         # (heads, a, d)
    w_qa = (jnp.einsum("xhd,had->xha", wq_t, agent) * scale).reshape(dim, heads * a)
    w_ka = jnp.einsum("xhd,had->xha", wk_t, agent).reshape(dim, heads * a)
    w_merged = jnp.concatenate([wv_t, w_qa, w_ka], axis=1).astype(BF16)  # (dim, dim+2*heads*a)
    x_bf = x.astype(BF16)

    # ---- Kernel A: merged projection + agent attention (n-tiled, online k-softmax) ----
    tile_n = _pick_tile_n(n)
    qa, kv_da = pl.pallas_call(
        functools.partial(_proj_attn_kernel, heads=heads, dim_head=d, agent_num=a),
        grid=(b, n // tile_n),
        in_specs=[
            pl.BlockSpec((1, tile_n, dim), lambda bi, ni: (bi, ni, 0)),
            pl.BlockSpec((dim, dim + 2 * heads * a), lambda bi, ni: (0, 0)),
        ],
        out_specs=[
            pl.BlockSpec((1, tile_n, heads * a), lambda bi, ni: (bi, ni, 0)),
            pl.BlockSpec((1, d, heads * a), lambda bi, ni: (bi, 0, 0)),
        ],
        out_shape=(
            jax.ShapeDtypeStruct((b, n, heads * a), BF16),      # q-attention, lane-dense bf16
            jax.ShapeDtypeStruct((b, d, heads * a), F32),       # kv (transposed per-head layout)
        ),
        scratch_shapes=[
            pltpu.VMEM((1, heads * a), F32),                    # running max  (k-softmax)
            pltpu.VMEM((1, heads * a), F32),                    # running sum  (k-softmax)
            pltpu.VMEM((d, heads * a), F32),                    # kv accumulator
        ],
        compiler_params=pltpu.CompilerParams(
            dimension_semantics=("parallel", "arbitrary"), vmem_limit_bytes=vmem_limit),
    )(x_bf, w_merged)

    # ---- glue (tiny, per batch): global threshold + denoise|mask gating + kv2 softmax ----
    kv_bhad = kv_da.reshape(b, d, heads, a).transpose(0, 2, 3, 1)        # (b, heads, a, d) fp32
    kv_c = kv_bhad.reshape(b, a, heads * d)                              # raw reshape (== torch)
    thr = jax.nn.sigmoid(jnp.mean(kv_c @ params["thresh_w"].T.astype(F32))
                         + params["thresh_b"].astype(F32)[0])
    den = jax.nn.sigmoid(kv_bhad @ params["denoise_w"].T.astype(F32)
                         + params["denoise_b"].astype(F32))
    msk = jax.nn.sigmoid(kv_bhad @ params["mask_w"].T.astype(F32)
                         + params["mask_b"].astype(F32))
    kv2 = jax.nn.softmax(jnp.where(msk > thr, kv_bhad, 0.0) + den, axis=-1).astype(BF16)

    # ---- Kernel C: out = q_attn @ kv2 in the final (b, n, heads*d) layout (bf16) ----
    tile_nc = _pick_tile_n(n)
    out = pl.pallas_call(
        functools.partial(_out_kernel, heads=heads, dim_head=d, agent_num=a),
        grid=(b, n // tile_nc),
        in_specs=[
            pl.BlockSpec((1, tile_nc, heads * a), lambda bi, ni: (bi, ni, 0)),
            pl.BlockSpec((1, heads, a, d), lambda bi, ni: (bi, 0, 0, 0)),
        ],
        out_specs=pl.BlockSpec((1, tile_nc, heads * d), lambda bi, ni: (bi, ni, 0)),
        out_shape=jax.ShapeDtypeStruct((b, n, heads * d), BF16),
        compiler_params=pltpu.CompilerParams(
            dimension_semantics=("parallel", "parallel"), vmem_limit_bytes=vmem_limit),
    )(qa, kv2)

    forward_return = {"amd_out": out}
    if return_WSI_attn:
        # Debug-only path, plain JAX (not a kernel).
        sk = jnp.matmul(x_bf, w_merged[:, dim + heads * a:], preferred_element_type=F32)
        katt = jax.nn.softmax(sk.reshape(b, n, heads, a).transpose(0, 2, 3, 1), axis=-1)
        qatt = qa.astype(F32).reshape(b, n, heads, a).transpose(0, 2, 1, 3)
        forward_return["WSI_attn"] = jnp.matmul(qatt, katt)
    return forward_return


# --------------------------- pure-JAX reference -------------------------------
# Same math / op order as the torch module, with bf16 operands + fp32 accumulation on
# the large matmuls (matching the kernel's precision policy).

def amd_layer_reference(x, params, *, heads, agent_num):
    def mm(u, w):
        return jnp.matmul(u.astype(BF16), w.astype(BF16), preferred_element_type=F32)

    b, n, dim = x.shape
    d = dim // heads
    scale = float(d) ** -0.5
    qkv = mm(x, params["to_qkv_w"].T)
    q, k, v = jnp.split(qkv, 3, axis=-1)
    rearr = lambda t: t.reshape(b, n, heads, d).transpose(0, 2, 1, 3)
    q, k, v = map(rearr, (q, k, v))
    agent = jnp.broadcast_to(params["agent"][None], (b, heads, agent_num, d)).astype(F32)
    q = jax.nn.softmax(mm(q, jnp.swapaxes(agent, -1, -2)) * scale, axis=-1)
    k = jax.nn.softmax(mm(agent, jnp.swapaxes(k, -1, -2)), axis=-1)
    kv = mm(k, v)
    kv_c = kv.reshape(b, agent_num, -1)
    thresh = jax.nn.sigmoid(jnp.mean(kv_c @ params["thresh_w"].T + params["thresh_b"]))
    den = jax.nn.sigmoid(kv @ params["denoise_w"].T + params["denoise_b"])
    msk = jax.nn.sigmoid(kv @ params["mask_w"].T + params["mask_b"])
    kv2 = jax.nn.softmax(jnp.where(msk > thresh, kv, 0.0) + den, axis=-1)
    out = mm(q, kv2)
    return out.transpose(0, 2, 1, 3).reshape(b, n, heads * d)


# ----------------------------------- main --------------------------------------

def make_params(key, dim, heads, agent_num):
    d = dim // heads
    ks = jax.random.split(key, 8)
    return {
        "to_qkv_w": jax.random.normal(ks[0], (3 * dim, dim), F32) * 0.1,
        "agent": jax.random.normal(ks[1], (heads, agent_num, d), F32),
        "denoise_w": jax.random.normal(ks[2], (d, d), F32) * 0.1,
        "denoise_b": jax.random.normal(ks[3], (d,), F32) * 0.1,
        "mask_w": jax.random.normal(ks[4], (d, d), F32) * 0.1,
        "mask_b": jax.random.normal(ks[5], (d,), F32) * 0.1,
        "thresh_w": jax.random.normal(ks[6], (1, dim), F32) * 0.1,
        # Bias shifted so the hard `mask > thresh` comparison has a wide margin:
        # the bf16-kernel vs reference check then cannot flip at the decision boundary.
        "thresh_b": jax.random.normal(ks[7], (1,), F32) * 0.1 - 4.0,
    }


if __name__ == "__main__":
    B, N, DIM, HEADS, AGENT_NUM = 2, 8, 32, 4, 16

    key = jax.random.PRNGKey(0)
    kx, kp = jax.random.split(key)
    x = jax.random.normal(kx, (B, N, DIM), F32)
    params = make_params(kp, DIM, HEADS, AGENT_NUM)

    result = amd_layer_forward(x, params, heads=HEADS, agent_num=AGENT_NUM)
    amd_out = jax.block_until_ready(result["amd_out"])

    ref = amd_layer_reference(x, params, heads=HEADS, agent_num=AGENT_NUM)
    max_err = float(jnp.max(jnp.abs(amd_out.astype(F32) - ref)))
    # bf16 operands + folded (re-associated) agent projection + bf16 output -> loose abs tol.
    assert np.isfinite(max_err) and max_err < 4e-2, f"mismatch vs reference: {max_err}"

    print("KERNEL_OK")
</pallas_src>

<mosaic_0001>
module attributes {stable_mosaic.version = 11 : i64} {
  func.func @_proj_attn_kernel(%arg0: i32, %arg1: i32, %arg2: memref<1x8x32xbf16, #tpu.memory_space<vmem>>, %arg3: memref<32x160xbf16, #tpu.memory_space<vmem>>, %arg4: memref<1x8x64xbf16, #tpu.memory_space<vmem>>, %arg5: memref<1x8x64xf32, #tpu.memory_space<vmem>>, %arg6: memref<1x64xf32, #tpu.memory_space<vmem>>, %arg7: memref<1x64xf32, #tpu.memory_space<vmem>>, %arg8: memref<8x64xf32, #tpu.memory_space<vmem>>) attributes {dimension_semantics = [#tpu.dimension_semantics<parallel>, #tpu.dimension_semantics<arbitrary>], iteration_bounds = array<i64: 2, 1>, scalar_prefetch = 0 : i64, scratch_operands = 3 : i64, tpu.core_type = #tpu.core_type<tc>, window_params = [{transform_indices = @transform_0, window_bounds = array<i64: 1, 8, 32>}, {pipeline_mode = #tpu.pipeline_mode<synchronous>, transform_indices = @transform_1, window_bounds = array<i64: 32, 160>}, {transform_indices = @transform_2, window_bounds = array<i64: 1, 8, 64>}, {transform_indices = @transform_3, window_bounds = array<i64: 1, 8, 64>}]} {
    %c0_i32 = arith.constant 0 : i32
    %0 = arith.cmpi eq, %arg1, %c0_i32 : i32
    %1 = arith.extui %0 : i1 to i32
    %c0_i32_0 = arith.constant 0 : i32
    %2 = arith.cmpi ne, %1, %c0_i32_0 : i32
    scf.if %2 {
      %cst_58 = arith.constant 0xFF800000 : f32
      %119 = vector.broadcast %cst_58 : f32 to vector<1x64xf32>
      %c0_59 = arith.constant 0 : index
      %c0_60 = arith.constant 0 : index
      %120 = vector.load %arg6[%c0_59, %c0_60] : memref<1x64xf32, #tpu.memory_space<vmem>>, vector<1x64xf32>
      tpu.vector_store %arg6[%c0_59, %c0_60], %119 {strides = array<i32>} : memref<1x64xf32, #tpu.memory_space<vmem>>, vector<1x64xf32>,
      %cst_61 = arith.constant 0.000000e+00 : f32
      %121 = vector.broadcast %cst_61 : f32 to vector<1x64xf32>
      %c0_62 = arith.constant 0 : index
      %c0_63 = arith.constant 0 : index
      %122 = vector.load %arg7[%c0_62, %c0_63] : memref<1x64xf32, #tpu.memory_space<vmem>>, vector<1x64xf32>
      tpu.vector_store %arg7[%c0_62, %c0_63], %121 {strides = array<i32>} : memref<1x64xf32, #tpu.memory_space<vmem>>, vector<1x64xf32>,
      %cst_64 = arith.constant 0.000000e+00 : f32
      %123 = vector.broadcast %cst_64 : f32 to vector<8x64xf32>
      %c0_65 = arith.constant 0 : index
      %c0_66 = arith.constant 0 : index
      %124 = vector.load %arg8[%c0_65, %c0_66] : memref<8x64xf32, #tpu.memory_space<vmem>>, vector<8x64xf32>
      tpu.vector_store %arg8[%c0_65, %c0_66], %123 {strides = array<i32>} : memref<8x64xf32, #tpu.memory_space<vmem>>, vector<8x64xf32>,
    } else {
    }
    %c0 = arith.constant 0 : index
    %c0_1 = arith.constant 0 : index
    %c0_2 = arith.constant 0 : index
    %3 = vector.load %arg2[%c0, %c0_1, %c0_2] : memref<1x8x32xbf16, #tpu.memory_space<vmem>>, vector<1x8x32xbf16>
    %4 = vector.shape_cast %3 : vector<1x8x32xbf16> to vector<8x32xbf16>
    %c0_3 = arith.constant 0 : index
    %c0_4 = arith.constant 0 : index
    %5 = vector.load %arg3[%c0_3, %c0_4] : memref<32x160xbf16, #tpu.memory_space<vmem>>, vector<32x160xbf16>
    %cst = arith.constant dense<0.000000e+00> : vector<8x160xf32>
    %6 = tpu.matmul %4, %5, %cst {dimension_numbers = #tpu.dot_dimension_numbers<[1], [0], [0], [1], [0, 0, 1, 1], [], []>} : vector<8x32xbf16>, vector<32x160xbf16>, vector<8x160xf32> -> vector<8x160xf32>
    %7 = vector.extract_strided_slice %6 {offsets = [0, 0], sizes = [8, 32], strides = [1, 1]} : vector<8x160xf32> to vector<8x32xf32>
    %8 = vector.extract_strided_slice %6 {offsets = [0, 32], sizes = [8, 64], strides = [1, 1]} : vector<8x160xf32> to vector<8x64xf32>
    %9 = vector.extract_strided_slice %6 {offsets = [0, 96], sizes = [8, 64], strides = [1, 1]} : vector<8x160xf32> to vector<8x64xf32>
    %10 = vector.extract_strided_slice %8 {offsets = [0, 0], sizes = [8, 16], strides = [1, 1]} : vector<8x64xf32> to vector<8x16xf32>
    %cst_5 = arith.constant dense<0xFF800000> : vector<8xf32>
    %11 = vector.multi_reduction <maximumf>, %10, %cst_5 [1] : vector<8x16xf32> to vector<8xf32>
    %12 = vector.shape_cast %11 : vector<8xf32> to vector<8x1xf32>
    %13 = vector.broadcast %12 : vector<8x1xf32> to vector<8x16xf32>
    %14 = arith.subf %10, %13 : vector<8x16xf32>
    %15 = math.exp %14 : vector<8x16xf32>
    %cst_6 = arith.constant dense<0.000000e+00> : vector<8xf32>
    %16 = vector.multi_reduction <add>, %15, %cst_6 [1] : vector<8x16xf32> to vector<8xf32>
    %17 = vector.shape_cast %16 : vector<8xf32> to vector<8x1xf32>
    %18 = tpu.reciprocal %17 {approx = true} : vector<8x1xf32> -> vector<8x1xf32>
    %19 = vector.broadcast %18 : vector<8x1xf32> to vector<8x16xf32>
    %20 = arith.mulf %15, %19 : vector<8x16xf32>
    %21 = arith.truncf %20 : vector<8x16xf32> to vector<8x16xbf16>
    %c0_7 = arith.constant 0 : index
    %c0_8 = arith.constant 0 : index
    %c0_9 = arith.constant 0 : index
    %22 = vector.load %arg4[%c0_7, %c0_8, %c0_9] : memref<1x8x64xbf16, #tpu.memory_space<vmem>>, vector<1x8x16xbf16>
    %23 = vector.shape_cast %22 : vector<1x8x16xbf16> to vector<8x16xbf16>
    %24 = vector.shape_cast %21 : vector<8x16xbf16> to vector<1x8x16xbf16>
    tpu.vector_store %arg4[%c0_7, %c0_8, %c0_9], %24 {strides = array<i32>} : memref<1x8x64xbf16, #tpu.memory_space<vmem>>, vector<1x8x16xbf16>,
    %25 = vector.extract_strided_slice %8 {offsets = [0, 16], sizes = [8, 16], strides = [1, 1]} : vector<8x64xf32> to vector<8x16xf32>
    %cst_10 = arith.constant dense<0xFF800000> : vector<8xf32>
    %26 = vector.multi_reduction <maximumf>, %25, %cst_10 [1] : vector<8x16xf32> to vector<8xf32>
    %27 = vector.shape_cast %26 : vector<8xf32> to vector<8x1xf32>
    %28 = vector.broadcast %27 : vector<8x1xf32> to vector<8x16xf32>
    %29 = arith.subf %25, %28 : vector<8x16xf32>
    %30 = math.exp %29 : vector<8x16xf32>
    %cst_11 = arith.constant dense<0.000000e+00> : vector<8xf32>
    %31 = vector.multi_reduction <add>, %30, %cst_11 [1] : vector<8x16xf32> to vector<8xf32>
    %32 = vector.shape_cast %31 : vector<8xf32> to vector<8x1xf32>
    %33 = tpu.reciprocal %32 {approx = true} : vector<8x1xf32> -> vector<8x1xf32>
    %34 = vector.broadcast %33 : vector<8x1xf32> to vector<8x16xf32>
    %35 = arith.mulf %30, %34 : vector<8x16xf32>
    %36 = arith.truncf %35 : vector<8x16xf32> to vector<8x16xbf16>
    %c0_12 = arith.constant 0 : index
    %c0_13 = arith.constant 0 : index
    %c16 = arith.constant 16 : index
    %37 = vector.load %arg4[%c0_12, %c0_13, %c16] : memref<1x8x64xbf16, #tpu.memory_space<vmem>>, vector<1x8x16xbf16>
    %38 = vector.shape_cast %37 : vector<1x8x16xbf16> to vector<8x16xbf16>
    %39 = vector.shape_cast %36 : vector<8x16xbf16> to vector<1x8x16xbf16>
    tpu.vector_store %arg4[%c0_12, %c0_13, %c16], %39 {strides = array<i32>} : memref<1x8x64xbf16, #tpu.memory_space<vmem>>, vector<1x8x16xbf16>,
    %40 = vector.extract_strided_slice %8 {offsets = [0, 32], sizes = [8, 16], strides = [1, 1]} : vector<8x64xf32> to vector<8x16xf32>
    %cst_14 = arith.constant dense<0xFF800000> : vector<8xf32>
    %41 = vector.multi_reduction <maximumf>, %40, %cst_14 [1] : vector<8x16xf32> to vector<8xf32>
    %42 = vector.shape_cast %41 : vector<8xf32> to vector<8x1xf32>
    %43 = vector.broadcast %42 : vector<8x1xf32> to vector<8x16xf32>
    %44 = arith.subf %40, %43 : vector<8x16xf32>
    %45 = math.exp %44 : vector<8x16xf32>
    %cst_15 = arith.constant dense<0.000000e+00> : vector<8xf32>
    %46 = vector.multi_reduction <add>, %45, %cst_15 [1] : vector<8x16xf32> to vector<8xf32>
    %47 = vector.shape_cast %46 : vector<8xf32> to vector<8x1xf32>
    %48 = tpu.reciprocal %47 {approx = true} : vector<8x1xf32> -> vector<8x1xf32>
    %49 = vector.broadcast %48 : vector<8x1xf32> to vector<8x16xf32>
    %50 = arith.mulf %45, %49 : vector<8x16xf32>
    %51 = arith.truncf %50 : vector<8x16xf32> to vector<8x16xbf16>
    %c0_16 = arith.constant 0 : index
    %c0_17 = arith.constant 0 : index
    %c32 = arith.constant 32 : index
    %52 = vector.load %arg4[%c0_16, %c0_17, %c32] : memref<1x8x64xbf16, #tpu.memory_space<vmem>>, vector<1x8x16xbf16>
    %53 = vector.shape_cast %52 : vector<1x8x16xbf16> to vector<8x16xbf16>
    %54 = vector.shape_cast %51 : vector<8x16xbf16> to vector<1x8x16xbf16>
    tpu.vector_store %arg4[%c0_16, %c0_17, %c32], %54 {strides = array<i32>} : memref<1x8x64xbf16, #tpu.memory_space<vmem>>, vector<1x8x16xbf16>,
    %55 = vector.extract_strided_slice %8 {offsets = [0, 48], sizes = [8, 16], strides = [1, 1]} : vector<8x64xf32> to vector<8x16xf32>
    %cst_18 = arith.constant dense<0xFF800000> : vector<8xf32>
    %56 = vector.multi_reduction <maximumf>, %55, %cst_18 [1] : vector<8x16xf32> to vector<8xf32>
    %57 = vector.shape_cast %56 : vector<8xf32> to vector<8x1xf32>
    %58 = vector.broadcast %57 : vector<8x1xf32> to vector<8x16xf32>
    %59 = arith.subf %55, %58 : vector<8x16xf32>
    %60 = math.exp %59 : vector<8x16xf32>
    %cst_19 = arith.constant dense<0.000000e+00> : vector<8xf32>
    %61 = vector.multi_reduction <add>, %60, %cst_19 [1] : vector<8x16xf32> to vector<8xf32>
    %62 = vector.shape_cast %61 : vector<8xf32> to vector<8x1xf32>
    %63 = tpu.reciprocal %62 {approx = true} : vector<8x1xf32> -> vector<8x1xf32>
    %64 = vector.broadcast %63 : vector<8x1xf32> to vector<8x16xf32>
    %65 = arith.mulf %60, %64 : vector<8x16xf32>
    %66 = arith.truncf %65 : vector<8x16xf32> to vector<8x16xbf16>
    %c0_20 = arith.constant 0 : index
    %c0_21 = arith.constant 0 : index
    %c48 = arith.constant 48 : index
    %67 = vector.load %arg4[%c0_20, %c0_21, %c48] : memref<1x8x64xbf16, #tpu.memory_space<vmem>>, vector<1x8x16xbf16>
    %68 = vector.shape_cast %67 : vector<1x8x16xbf16> to vector<8x16xbf16>
    %69 = vector.shape_cast %66 : vector<8x16xbf16> to vector<1x8x16xbf16>
    tpu.vector_store %arg4[%c0_20, %c0_21, %c48], %69 {strides = array<i32>} : memref<1x8x64xbf16, #tpu.memory_space<vmem>>, vector<1x8x16xbf16>,
    %c0_22 = arith.constant 0 : index
    %c0_23 = arith.constant 0 : index
    %70 = vector.load %arg6[%c0_22, %c0_23] : memref<1x64xf32, #tpu.memory_space<vmem>>, vector<1x64xf32>
    %cst_24 = arith.constant dense<0xFF800000> : vector<64xf32>
    %71 = vector.multi_reduction <maximumf>, %9, %cst_24 [0] : vector<8x64xf32> to vector<64xf32>
    %72 = vector.shape_cast %71 : vector<64xf32> to vector<1x64xf32>
    %73 = arith.maximumf %70, %72 : vector<1x64xf32>
    %74 = arith.subf %70, %73 : vector<1x64xf32>
    %75 = math.exp %74 : vector<1x64xf32>
    %76 = vector.broadcast %73 : vector<1x64xf32> to vector<8x64xf32>
    %77 = arith.subf %9, %76 : vector<8x64xf32>
    %78 = math.exp %77 : vector<8x64xf32>
    %c0_25 = arith.constant 0 : index
    %c0_26 = arith.constant 0 : index
    %79 = vector.load %arg7[%c0_25, %c0_26] : memref<1x64xf32, #tpu.memory_space<vmem>>, vector<1x64xf32>
    %80 = arith.mulf %75, %79 : vector<1x64xf32>
    %cst_27 = arith.constant dense<0.000000e+00> : vector<64xf32>
    %81 = vector.multi_reduction <add>, %78, %cst_27 [0] : vector<8x64xf32> to vector<64xf32>
    %82 = vector.shape_cast %81 : vector<64xf32> to vector<1x64xf32>
    %83 = arith.addf %80, %82 : vector<1x64xf32>
    %c0_28 = arith.constant 0 : index
    %c0_29 = arith.constant 0 : index
    %84 = vector.load %arg7[%c0_28, %c0_29] : memref<1x64xf32, #tpu.memory_space<vmem>>, vector<1x64xf32>
    tpu.vector_store %arg7[%c0_28, %c0_29], %83 {strides = array<i32>} : memref<1x64xf32, #tpu.memory_space<vmem>>, vector<1x64xf32>,
    %c0_30 = arith.constant 0 : index
    %c0_31 = arith.constant 0 : index
    %85 = vector.load %arg6[%c0_30, %c0_31] : memref<1x64xf32, #tpu.memory_space<vmem>>, vector<1x64xf32>
    tpu.vector_store %arg6[%c0_30, %c0_31], %73 {strides = array<i32>} : memref<1x64xf32, #tpu.memory_space<vmem>>, vector<1x64xf32>,
    %c0_32 = arith.constant 0 : index
    %c0_33 = arith.constant 0 : index
    %86 = vector.load %arg8[%c0_32, %c0_33] : memref<8x64xf32, #tpu.memory_space<vmem>>, vector<8x64xf32>
    %87 = vector.broadcast %75 : vector<1x64xf32> to vector<8x64xf32>
    %88 = arith.mulf %86, %87 : vector<8x64xf32>
    %c0_34 = arith.constant 0 : index
    %c0_35 = arith.constant 0 : index
    %89 = vector.load %arg8[%c0_34, %c0_35] : memref<8x64xf32, #tpu.memory_space<vmem>>, vector<8x64xf32>
    tpu.vector_store %arg8[%c0_34, %c0_35], %88 {strides = array<i32>} : memref<8x64xf32, #tpu.memory_space<vmem>>, vector<8x64xf32>,
    %90 = arith.truncf %78 : vector<8x64xf32> to vector<8x64xbf16>
    %91 = arith.truncf %7 : vector<8x32xf32> to vector<8x32xbf16>
    %92 = vector.extract_strided_slice %91 {offsets = [0, 0], sizes = [8, 8], strides = [1, 1]} : vector<8x32xbf16> to vector<8x8xbf16>
    %93 = vector.extract_strided_slice %90 {offsets = [0, 0], sizes = [8, 16], strides = [1, 1]} : vector<8x64xbf16> to vector<8x16xbf16>
    %cst_36 = arith.constant dense<0.000000e+00> : vector<8x16xf32>
    %94 = tpu.matmul %92, %93, %cst_36 {dimension_numbers = #tpu.dot_dimension_numbers<[0], [0], [1], [1], [0, 1, 1, 1], [], []>} : vector<8x8xbf16>, vector<8x16xbf16>, vector<8x16xf32> -> vector<8x16xf32>
    %c0_37 = arith.constant 0 : index
    %c0_38 = arith.constant 0 : index
    %95 = vector.load %arg8[%c0_37, %c0_38] : memref<8x64xf32, #tpu.memory_space<vmem>>, vector<8x16xf32>
    %96 = arith.addf %95, %94 : vector<8x16xf32>
    %c0_39 = arith.constant 0 : index
    %c0_40 = arith.constant 0 : index
    %97 = vector.load %arg8[%c0_39, %c0_40] : memref<8x64xf32, #tpu.memory_space<vmem>>, vector<8x16xf32>
    tpu.vector_store %arg8[%c0_39, %c0_40], %96 {strides = array<i32>} : memref<8x64xf32, #tpu.memory_space<vmem>>, vector<8x16xf32>,
    %98 = vector.extract_strided_slice %91 {offsets = [0, 8], sizes = [8, 8], strides = [1, 1]} : vector<8x32xbf16> to vector<8x8xbf16>
    %99 = vector.extract_strided_slice %90 {offsets = [0, 16], sizes = [8, 16], strides = [1, 1]} : vector<8x64xbf16> to vector<8x16xbf16>
    %cst_41 = arith.constant dense<0.000000e+00> : vector<8x16xf32>
    %100 = tpu.matmul %98, %99, %cst_41 {dimension_numbers = #tpu.dot_dimension_numbers<[0], [0], [1], [1], [0, 1, 1, 1], [], []>} : vector<8x8xbf16>, vector<8x16xbf16>, vector<8x16xf32> -> vector<8x16xf32>
    %c0_42 = arith.constant 0 : index
    %c16_43 = arith.constant 16 : index
    %101 = vector.load %arg8[%c0_42, %c16_43] : memref<8x64xf32, #tpu.memory_space<vmem>>, vector<8x16xf32>
    %102 = arith.addf %101, %100 : vector<8x16xf32>
    %c0_44 = arith.constant 0 : index
    %c16_45 = arith.constant 16 : index
    %103 = vector.load %arg8[%c0_44, %c16_45] : memref<8x64xf32, #tpu.memory_space<vmem>>, vector<8x16xf32>
    tpu.vector_store %arg8[%c0_44, %c16_45], %102 {strides = array<i32>} : memref<8x64xf32, #tpu.memory_space<vmem>>, vector<8x16xf32>,
    %104 = vector.extract_strided_slice %91 {offsets = [0, 16], sizes = [8, 8], strides = [1, 1]} : vector<8x32xbf16> to vector<8x8xbf16>
    %105 = vector.extract_strided_slice %90 {offsets = [0, 32], sizes = [8, 16], strides = [1, 1]} : vector<8x64xbf16> to vector<8x16xbf16>
    %cst_46 = arith.constant dense<0.000000e+00> : vector<8x16xf32>
    %106 = tpu.matmul %104, %105, %cst_46 {dimension_numbers = #tpu.dot_dimension_numbers<[0], [0], [1], [1], [0, 1, 1, 1], [], []>} : vector<8x8xbf16>, vector<8x16xbf16>, vector<8x16xf32> -> vector<8x16xf32>
    %c0_47 = arith.constant 0 : index
    %c32_48 = arith.constant 32 : index
    %107 = vector.load %arg8[%c0_47, %c32_48] : memref<8x64xf32, #tpu.memory_space<vmem>>, vector<8x16xf32>
    %108 = arith.addf %107, %106 : vector<8x16xf32>
    %c0_49 = arith.constant 0 : index
    %c32_50 = arith.constant 32 : index
    %109 = vector.load %arg8[%c0_49, %c32_50] : memref<8x64xf32, #tpu.memory_space<vmem>>, vector<8x16xf32>
    tpu.vector_store %arg8[%c0_49, %c32_50], %108 {strides = array<i32>} : memref<8x64xf32, #tpu.memory_space<vmem>>, vector<8x16xf32>,
    %110 = vector.extract_strided_slice %91 {offsets = [0, 24], sizes = [8, 8], strides = [1, 1]} : vector<8x32xbf16> to vector<8x8xbf16>
    %111 = vector.extract_strided_slice %90 {offsets = [0, 48], sizes = [8, 16], strides = [1, 1]} : vector<8x64xbf16> to vector<8x16xbf16>
    %cst_51 = arith.constant dense<0.000000e+00> : vector<8x16xf32>
    %112 = tpu.matmul %110, %111, %cst_51 {dimension_numbers = #tpu.dot_dimension_numbers<[0], [0], [1], [1], [0, 1, 1, 1], [], []>} : vector<8x8xbf16>, vector<8x16xbf16>, vector<8x16xf32> -> vector<8x16xf32>
    %c0_52 = arith.constant 0 : index
    %c48_53 = arith.constant 48 : index
    %113 = vector.load %arg8[%c0_52, %c48_53] : memref<8x64xf32, #tpu.memory_space<vmem>>, vector<8x16xf32>
    %114 = arith.addf %113, %112 : vector<8x16xf32>
    %c0_54 = arith.constant 0 : index
    %c48_55 = arith.constant 48 : index
    %115 = vector.load %arg8[%c0_54, %c48_55] : memref<8x64xf32, #tpu.memory_space<vmem>>, vector<8x16xf32>
    tpu.vector_store %arg8[%c0_54, %c48_55], %114 {strides = array<i32>} : memref<8x64xf32, #tpu.memory_space<vmem>>, vector<8x16xf32>,
    %c0_i32_56 = arith.constant 0 : i32
    %116 = arith.cmpi eq, %arg1, %c0_i32_56 : i32
    %117 = arith.extui %116 : i1 to i32
    %c0_i32_57 = arith.constant 0 : i32
    %118 = arith.cmpi ne, %117, %c0_i32_57 : i32
    scf.if %118 {
      %c0_58 = arith.constant 0 : index
      %c0_59 = arith.constant 0 : index
      %119 = vector.load %arg8[%c0_58, %c0_59] : memref<8x64xf32, #tpu.memory_space<vmem>>, vector<8x64xf32>
      %c0_60 = arith.constant 0 : index
      %c0_61 = arith.constant 0 : index
      %120 = vector.load %arg7[%c0_60, %c0_61] : memref<1x64xf32, #tpu.memory_space<vmem>>, vector<1x64xf32>
      %121 = vector.broadcast %120 : vector<1x64xf32> to vector<8x64xf32>
      %122 = arith.divf %119, %121 : vector<8x64xf32>
      %c0_62 = arith.constant 0 : index
      %c0_63 = arith.constant 0 : index
      %c0_64 = arith.constant 0 : index
      %123 = vector.load %arg5[%c0_62, %c0_63, %c0_64] : memref<1x8x64xf32, #tpu.memory_space<vmem>>, vector<1x8x64xf32>
      %124 = vector.shape_cast %123 : vector<1x8x64xf32> to vector<8x64xf32>
      %125 = vector.shape_cast %122 : vector<8x64xf32> to vector<1x8x64xf32>
      tpu.vector_store %arg5[%c0_62, %c0_63, %c0_64], %125 {strides = array<i32>} : memref<1x8x64xf32, #tpu.memory_space<vmem>>, vector<1x8x64xf32>,
    } else {
    }
    return
  }
  func.func @transform_0(%arg0: i32, %arg1: i32) -> (i32, i32, i32) {
    %c0_i32 = arith.constant 0 : i32
    %c0_i32_0 = arith.constant 0 : i32
    return %arg0, %arg1, %c0_i32 : i32, i32, i32
  }
  func.func @transform_1(%arg0: i32, %arg1: i32) -> (i32, i32) {
    %c0_i32 = arith.constant 0 : i32
    %c0_i32_0 = arith.constant 0 : i32
    %c0_i32_1 = arith.constant 0 : i32
    return %c0_i32, %c0_i32_0 : i32, i32
  }
  func.func @transform_2(%arg0: i32, %arg1: i32) -> (i32, i32, i32) {
    %c0_i32 = arith.constant 0 : i32
    %c0_i32_0 = arith.constant 0 : i32
    return %arg0, %arg1, %c0_i32 : i32, i32, i32
  }
  func.func @transform_3(%arg0: i32, %arg1: i32) -> (i32, i32, i32) {
    %c0_i32 = arith.constant 0 : i32
    %c0_i32_0 = arith.constant 0 : i32
    %c0_i32_1 = arith.constant 0 : i32
    return %arg0, %c0_i32, %c0_i32_0 : i32, i32, i32
  }
}

</mosaic_0001>

<llo_original>
// kernel: tpu_custom_call.1
$region0: #{tpu_custom_call.1}
  #allocation0 [shape = 'u32[]', space=smem, size = 0x4, offset = 0x4, fixed_abs, tag = 'smem constant byte address 0x4 - core index']
  #allocation1 [shape = 'u32[144,128]{1,0:T(1,128)}', space=vmem, size = 0x12000, scoped, tag = 'internal scratch']
  #allocation2 [shape = 'f32[1,64]{1,0:T(1,128)}', space=vmem, size = 0x200, scoped, tag = 'scratch operand']
  #allocation3 [shape = 'f32[1,64]{1,0:T(1,128)}', space=vmem, size = 0x200, scoped, tag = 'scratch operand']
  #allocation4 [shape = 'f32[8,64]{1,0:T(8,128)}', space=vmem, size = 0x1000, scoped, tag = 'scratch operand']
  %s0 = inlined_call_operand.hbm [shape: bf16[2,8,32], index: 0, kind: input, shape index: {}]
  %s1 = inlined_call_operand.hbm [shape: bf16[32,160], index: 1, kind: input, shape index: {}]
  %s2 = inlined_call_operand.hbm [shape: bf16[2,8,64], index: 2, kind: output, shape index: {0}]
  %s3 = inlined_call_operand.hbm [shape: f32[2,8,64], index: 3, kind: output, shape index: {1}]
  %4 = xla_tuple %s2, %s3
  %s5 = sld [smem:[#allocation0]]
  $region65: #{tpu_custom_call.1} parent=0
    _
  %s7 = ssub.s32 1, %s5
  %s8 = scalar_select 0, %s7, %s5
  $region1: #{tpu_custom_call.1} parent=0
    #allocation5 [shape = 'u8[4096]{0}', space=vmem, size = 0x1000, scoped, tag = 'input window, operand 0']
    #allocation6 [shape = 's32[2]{0}', space=sflag, size = 0x8, scoped, tag = 'scoped memory for tpu_custom_call.1']
    #allocation7 [shape = 's32[2]{0}', space=sflag, size = 0x8, scoped, tag = 'scoped memory for tpu_custom_call.1']
    #allocation8 [shape = 'u8[16384]{0}', space=vmem, size = 0x4000, scoped, tag = 'input window, operand 1, single buffered']
    #allocation9 [shape = 's32[1]{0}', space=sflag, size = 0x4, scoped, tag = 'scoped memory for tpu_custom_call.1']
    #allocation10 [shape = 'u8[4096]{0}', space=vmem, size = 0x1000, scoped, tag = 'output window, operand 0']
    #allocation11 [shape = 'u8[8192]{0}', space=vmem, size = 0x2000, scoped, tag = 'output window, operand 1']
    #allocation12 [shape = 's32[2]{0}', space=sflag, size = 0x8, scoped, tag = 'scoped memory for tpu_custom_call.1']
    %9 = vsyncpa [#allocation6], 0
    %s10 = scalar_lea.sflag [#allocation6], 1
    %11 = vsyncpa %s10, 0
    %12 = vsyncpa [#allocation9], 0
    %13 = vsyncpa [#allocation7], 0
    %s14 = scalar_lea.sflag [#allocation7], 1
    %15 = vsyncpa %s14, 0
    %16 = vsyncpa [#allocation12], 0
    %s17 = scalar_lea.sflag [#allocation12], 1
    %18 = vsyncpa %s17, 0
    loop: start=0, step=1, limit=4
    $region2: #{tpu_custom_call.1} parent=1 // loop_pre_header
      _
    $region3: #{tpu_custom_call.1} parent=1 // loop_header
      %s20 = sphi 0, %s24
      %p21 = scmp.ge.s32.totalorder %s20, 4
      %s27 = sphi 0, %s39
      %s28 = sphi 0, %s35
      %s29 = sphi 0, %s27
      %s30 = sphi 0, %s28
      %s31 = sphi 0, %s29
      %s32 = sphi 0, %s30
      %s44 = sphi 0, %s46
      %s47 = sphi 0, %s44
      %s48 = sphi 0, %s47
      %s64 = sphi 0, %s48
      %s68 = sphi 0, %s68
      %s70 = sphi 0, %s68
      %s71 = sphi 0, %s70
      %s85 = sphi 0, %s71
      %s93 = sphi 0, %s95
      %s96 = sphi 0, %s93
      %s97 = sphi 0, %s96
      %s113 = sphi 0, %s97
      %s119 = sphi 0, %s121
      %s122 = sphi 0, %s119
      %s123 = sphi 0, %s122
      %s139 = sphi 0, %s123
    $region4: #{tpu_custom_call.1} parent=1 // loop_header_branch
      %23 = sbr.rel (%p21) target = $region8
    $region5: #{tpu_custom_call.1} parent=1 // loop_body
      %s25 = ssub.s32 %s20, 1
      %s26 = ssub.s32 %s20, 2
      %s33 = sadd.s32 1, %s28
      %p34 = scmp.ge.s32.totalorder %s33, 1
      %s35 = scalar_select %p34, 0, %s33
      %s36 = sadd.s32 1, %s27
      %s37 = scalar_select %p34, %s36, %s27
      %p38 = scmp.ge.s32.totalorder %s37, 2
      %s39 = scalar_select %p38, 0, %s37
      %s40 = ssub.s32 %s27, %s39
      %s41 = ssub.s32 %s28, %s35
      %s42 = sor.u32 %s40, %s41
      %p43 = scmp.eq.s32.totalorder %s42, 0
      %s45 = sadd.s32 %s44, 1
      %s46 = scalar_select %p43, %s44, %s45
      %p49 = pneg %p43
      %p50 = scmp.eq.s32.totalorder %s20, 1
      %p51 = por %p49, %p50
      %p52 = scmp.ne.s32.totalorder %s44, %s47
      %p53 = scmp.eq.s32.totalorder %s20, 0
      %p54 = por %p52, %p53
      %p55 = scmp.ne.s32.totalorder %s44, %s47
      %p56 = scmp.eq.s32.totalorder %s25, 1
      %p57 = por %p55, %p56
      %p58 = scmp.ne.s32.totalorder %s47, %s48
      %p59 = scmp.eq.s32.totalorder %s25, 0
      %p60 = por %p58, %p59
      %p61 = scmp.ne.s32.totalorder %s47, %s48
      %p62 = scmp.eq.s32.totalorder %s26, 1
      %p63 = por %p61, %p62
      %p65 = scmp.ne.s32.totalorder %s48, %s64
      %p66 = scmp.eq.s32.totalorder %s26, 0
      %p67 = por %p65, %p66
      %s69 = sadd.s32 %s68, 1
      %p72 = scmp.eq.s32.totalorder %s20, 1
      %p73 = scmp.ne.s32.totalorder %s68, %s70
      %p74 = scmp.eq.s32.totalorder %s20, 0
      %p75 = por %p73, %p74
      %p76 = scmp.ne.s32.totalorder %s68, %s70
      %p77 = scmp.eq.s32.totalorder %s25, 1
      %p78 = por %p76, %p77
      %p79 = scmp.ne.s32.totalorder %s70, %s71
      %p80 = scmp.eq.s32.totalorder %s25, 0
      %p81 = por %p79, %p80
      %p82 = scmp.ne.s32.totalorder %s70, %s71
      %p83 = scmp.eq.s32.totalorder %s26, 1
      %p84 = por %p82, %p83
      %p86 = scmp.ne.s32.totalorder %s71, %s85
      %p87 = scmp.eq.s32.totalorder %s26, 0
      %p88 = por %p86, %p87
      %s89 = ssub.s32 %s27, %s39
      %s90 = ssub.s32 %s28, %s35
      %s91 = sor.u32 %s89, %s90
      %p92 = scmp.eq.s32.totalorder %s91, 0
      %s94 = sadd.s32 %s93, 1
      %s95 = scalar_select %p92, %s93, %s94
      %p98 = pneg %p92
      %p99 = scmp.eq.s32.totalorder %s20, 1
      %p100 = por %p98, %p99
      %p101 = scmp.ne.s32.totalorder %s93, %s96
      %p102 = scmp.eq.s32.totalorder %s20, 0
      %p103 = por %p101, %p102
      %p104 = scmp.ne.s32.totalorder %s93, %s96
      %p105 = scmp.eq.s32.totalorder %s25, 1
      %p106 = por %p104, %p105
      %p107 = scmp.ne.s32.totalorder %s96, %s97
      %p108 = scmp.eq.s32.totalorder %s25, 0
      %p109 = por %p107, %p108
      %p110 = scmp.ne.s32.totalorder %s96, %s97
      %p111 = scmp.eq.s32.totalorder %s26, 1
      %p112 = por %p110, %p111
      %p114 = scmp.ne.s32.totalorder %s97, %s113
      %p115 = scmp.eq.s32.totalorder %s26, 0
      %p116 = por %p114, %p115
      %s117 = ssub.s32 %s27, %s39
      %p118 = scmp.eq.s32.totalorder %s117, 0
      %s120 = sadd.s32 %s119, 1
      %s121 = scalar_select %p118, %s119, %s120
      %p124 = pneg %p118
      %p125 = scmp.eq.s32.totalorder %s20, 1
      %p126 = por %p124, %p125
      %p127 = scmp.ne.s32.totalorder %s119, %s122
      %p128 = scmp.eq.s32.totalorder %s20, 0
      %p129 = por %p127, %p128
      %p130 = scmp.ne.s32.totalorder %s119, %s122
      %p131 = scmp.eq.s32.totalorder %s25, 1
      %p132 = por %p130, %p131
      %p133 = scmp.ne.s32.totalorder %s122, %s123
      %p134 = scmp.eq.s32.totalorder %s25, 0
      %p135 = por %p133, %p134
      %p136 = scmp.ne.s32.totalorder %s122, %s123
      %p137 = scmp.eq.s32.totalorder %s26, 1
      %p138 = por %p136, %p137
      %p140 = scmp.ne.s32.totalorder %s123, %s139
      %p141 = scmp.eq.s32.totalorder %s26, 0
      %p142 = por %p140, %p141
      %p143 = scmp.le.s32.totalorder 1, %s20
      %p144 = scmp.lt.s32.totalorder %s20, 3
      %p145 = pnand %p143, %p144
      %p146 = pneg %p145
      // Predicated region
      $region9: #{tpu_custom_call.1} parent=5 // pred_check
        _
      $region10: #{tpu_custom_call.1} parent=5 // pred_check_branch
        %148 = sbr.rel (%p145) target = $region12
      $region11: #{tpu_custom_call.1} parent=5 // pred_region
        %s149 = ssub.s32 %s20, 1
        // Predicated region
        $region13: #{tpu_custom_call.1} parent=11 // pred_check
          %p150 = pneg %p81
        $region14: #{tpu_custom_call.1} parent=11 // pred_check_branch
          %152 = sbr.rel (%p150) target = $region16
        $region15: #{tpu_custom_call.1} parent=11 // pred_region
          %s154 = ssub.s32 512, 512
          %155 = vsyncadd [#allocation9], %s154
          %s156 = sshll.u32 [#allocation8], 4
          %s157 = int_to_ptr.vmem [resolvable:$true] %s156
          %162 = dma.hbm_to_vmem [thread:$0]  %s1, 512, %s157, [#allocation9], 128, 128, 8
        $region16: #{tpu_custom_call.1} parent=11 // pred_fallthru
          _
      $region12: #{tpu_custom_call.1} parent=5 // pred_fallthru
        _
      %p163 = scmp.lt.s32.totalorder %s20, 2
      // Predicated region
      $region17: #{tpu_custom_call.1} parent=5 // pred_check
        %p164 = pneg %p163
      $region18: #{tpu_custom_call.1} parent=5 // pred_check_branch
        %166 = sbr.rel (%p164) target = $region20
      $region19: #{tpu_custom_call.1} parent=5 // pred_region
        // Predicated region
        $region21: #{tpu_custom_call.1} parent=19 // pred_check
          %p167 = pneg %p54
        $region22: #{tpu_custom_call.1} parent=19 // pred_check_branch
          %169 = sbr.rel (%p167) target = $region24
        $region23: #{tpu_custom_call.1} parent=19 // pred_region
          %s170 = sand.u32 %s44, 1
          %s171 = scalar_lea.sflag [#allocation6], %s170
          %s172 = sand.u32 %s44, 1
          %s173 = smul.addr %s172, 4
          %s174 = scalar_lea.vmem [#allocation5], %s173
          %s176 = ssub.s32 64, 64
          %177 = vsyncadd %s171, %s176
          %s178 = sadd.s32 %s28, %s27
          %s179 = smul.addr %s178, 64
          %s180 = scalar_lea.hbm %s0, %s179
          %s182 = sshll.u32 %s174, 4
          %s183 = int_to_ptr.vmem [resolvable:$true] %s182
          %185 = dma.hbm_to_vmem [thread:$0]  %s180, 64, %s183, %s171
        $region24: #{tpu_custom_call.1} parent=19 // pred_fallthru
          _
      $region20: #{tpu_custom_call.1} parent=5 // pred_fallthru
        _
      %p186 = scmp.le.s32.totalorder 1, %s20
      %p187 = scmp.lt.s32.totalorder %s20, 3
      %p188 = pnand %p186, %p187
      %p189 = pneg %p188
      // Predicated region
      $region25: #{tpu_custom_call.1} parent=5 // pred_check
        _
      $region26: #{tpu_custom_call.1} parent=5 // pred_check_branch
        %191 = sbr.rel (%p188) target = $region28
      $region27: #{tpu_custom_call.1} parent=5 // pred_region
        %s192 = ssub.s32 %s20, 1
        %s193 = sand.u32 %s47, 1
        %s194 = scalar_lea.sflag [#allocation6], %s193
        %s195 = sand.u32 %s47, 1
        %s196 = smul.addr %s195, 4
        %s197 = scalar_lea.vmem [#allocation5], %s196
        // Predicated region
        $region29: #{tpu_custom_call.1} parent=27 // pred_check
          %p198 = pneg %p60
        $region30: #{tpu_custom_call.1} parent=27 // pred_check_branch
          %200 = sbr.rel (%p198) target = $region32
        $region31: #{tpu_custom_call.1} parent=27 // pred_region
          %201 = dma.done %s194, 64
        $region32: #{tpu_custom_call.1} parent=27 // pred_fallthru
          _
        // Predicated region
        $region33: #{tpu_custom_call.1} parent=27 // pred_check
          %p202 = pneg %p81
        $region34: #{tpu_custom_call.1} parent=27 // pred_check_branch
          %204 = sbr.rel (%p202) target = $region36
        $region35: #{tpu_custom_call.1} parent=27 // pred_region
          %205 = dma.done [#allocation9], 512
        $region36: #{tpu_custom_call.1} parent=27 // pred_fallthru
          _
        %s206 = sand.u32 %s47, 1
        %s207 = scalar_lea.sflag [#allocation6], %s206
        %s208 = sand.u32 %s47, 1
        %s209 = smul.addr %s208, 4
        %s210 = scalar_lea.vmem [#allocation5], %s209
        %p211 = pneg %p60
        %p212 = pneg %p57
        %p213 = pneg %p81
        %p214 = pneg %p78
        %p215 = pneg %p109
        %p216 = pneg %p106
        %s217 = sand.u32 %s96, 1
        %s218 = scalar_lea.sflag [#allocation7], %s217
        %s219 = sand.u32 %s96, 1
        %s220 = smul.addr %s219, 4
        %s221 = scalar_lea.vmem [#allocation10], %s220
        %p222 = pneg %p135
        %p223 = pneg %p132
        %s224 = sand.u32 %s122, 1
        %s225 = scalar_lea.sflag [#allocation12], %s224
        %s226 = sand.u32 %s122, 1
        %s227 = smul.addr %s226, 8
        %s228 = scalar_lea.vmem [#allocation11], %s227
        %p230 = scmp.eq.s32.totalorder %s30, 0
        // Predicated region
        $region37: #{tpu_custom_call.1} parent=27 // pred_check
          %p231 = pneg %p230
        $region38: #{tpu_custom_call.1} parent=27 // pred_check_branch
          %233 = sbr.rel (%p231) target = $region40
        $region39: #{tpu_custom_call.1} parent=27 // pred_region
          %vm234 = vcmask 516096
          %235 = vst.msk [vmem:[#allocation2] sm:$0x1] %vm234, -inf
          %236 = vst.msk [vmem:[#allocation3] sm:$0x1] %vm234, 0.0
          %vm237 = vcmask 523264
          %238 = vst.msk [vmem:[#allocation4] sm:$0xff] %vm237, 0.0
        $region40: #{tpu_custom_call.1} parent=27 // pred_fallthru
          _
        %v239 = vld [vmem:[%s197] sm:$0xf]
        %v240 = vld [vmem:[#allocation8] sm:$0xff]
        %v241 = vld [vmem:[#allocation8 + $0x8] sm:$0xff]
        %v242 = vld [vmem:[#allocation8 + $0x10] sm:$0xff]
        %v243 = vld [vmem:[#allocation8 + $0x18] sm:$0xff]
        %v248 = vunpack.c.l.b16 %v240
        %v249 = vunpack.c.h.b16 %v240
        %v250 = vunpack.c.l.b16 %v241
        %v251 = vunpack.c.h.b16 %v241
        %v252 = vunpack.c.l.b16 %v242
        %v253 = vunpack.c.h.b16 %v242
        %v254 = vunpack.c.l.b16 %v243
        %v255 = vunpack.c.h.b16 %v243
        %v256 = vpack.c.b16 %v250, %v248
        %v257 = vpack.c.b16 %v251, %v249
        %v258 = vpack.c.b16 %v254, %v252
        %v259 = vpack.c.b16 %v255, %v253
        %vm264 = vcmask 261120
        %v266 = vsel %vm264, %v239, 0
        %268 = vmatprep.subr.bf16.mxu0 %v257
        %269 = vmatpush1.bf16.msra.mxu0 %v256
        %270 = vmatprep.subr.bf16.mxu0 %v259
        %271 = vmatpush1.bf16.msra.mxu0 %v258
        %272 = vmatprep.subr.bf16.mxu0 0
        %273 = vmatpush1.bf16.msra.mxu0 0
        %274 = vmatprep.subr.bf16.mxu0 0
        %275 = vmatpush1.bf16.msra.mxu0 0
        %276 = vmatprep.subr.bf16.mxu0 0
        %277 = vmatpush1.bf16.msra.mxu0 0
        %278 = vmatprep.subr.bf16.mxu0 0
        %279 = vmatpush1.bf16.msra.mxu0 0
        %280 = vmatprep.subr.bf16.mxu0 0
        %281 = vmatpush1.bf16.msra.mxu0 0
        %282 = vmatprep.subr.bf16.mxu0 0
        %283 = vmatpush1.bf16.msra.mxu0 0
        %284 = vmatprep.subr.bf16.mxu0 0
        %285 = vmatpush1.bf16.msra.mxu0 0
        %286 = vmatprep.subr.bf16.mxu0 0
        %287 = vmatpush1.bf16.msra.mxu0 0
        %288 = vmatprep.subr.bf16.mxu0 0
        %289 = vmatpush1.bf16.msra.mxu0 0
        %290 = vmatprep.subr.bf16.mxu0 0
        %291 = vmatpush1.bf16.msra.mxu0 0
        %292 = vmatprep.subr.bf16.mxu0 0
        %293 = vmatpush1.bf16.msra.mxu0 0
        %294 = vmatprep.subr.bf16.mxu0 0
        %295 = vmatpush1.bf16.msra.mxu0 0
        %296 = vmatprep.subr.bf16.mxu0 0
        %297 = vmatpush1.bf16.msra.mxu0 0
        %298 = vmatprep.subr.bf16.mxu0 0
        %299 = vmatpush1.bf16.msra.mxu0 0
        %300 = vmatprep.mubr.bf16.mxu0 0
        %301 = vmatmul.mubr.bf16.gmra.mrb[0].mxu0 %v266
        %v302 = vpop.f32.mrb[0].mxu0
        %v303 = vadd.f32 0.0, %v302
        %v304 = vpop.f32.mrb[0].mxu0
        %v305 = vadd.f32 0.0, %v304
        %v306 = vpop.f32.mrb[0].mxu0
        %v307 = vpop.f32.mrb[0].mxu0
        %308 = vdwg.mxu0
        %vm309 = vcmask 392448
        %v310 = vsel %vm309, %v303, -inf
        %311 = vmax.xlane.f32.xlu0 %v310
        %v312 = vpop.xlane.xlu0 %311
        %v313 = vsub.f32 %v303, %v312
        %v314 = vmul.f32 %v313, 1.442695
        %v315 = vpow.pop %v314
        %317 = vrot.lane.b32.xlu0 %v315, 96
        %v318 = vpop.permute.xlu0 %317
        %vm320 = vcmask 130048
        %v321 = vsel %vm320, %v318, 0.0
        %322 = vadd.xlane.f32.xlu0 %v321
        %v323 = vpop.xlane.xlu0 %322
        %v324 = vrcp.pop %v323
        %v325 = vmul.f32 %v315, %v324
        %v326 = vpack.c.bf16 %v325, %v325
        %v328 = vunpack.c.l.b16 %v326
        %v329 = vpack.c.b16 %v328, %v328
        %330 = vrot.lane.b32.xlu0 %v329, 96
        %v331 = vpop.permute.xlu0 %330
        %vm333 = vcmask 125952
        %334 = vst.msk [vmem:[%s221] sm:$0xf] %vm333, %v331
        %vm335 = vcmask 523648
        %v336 = vsel %vm335, %v303, -inf
        %337 = vmax.xlane.f32.xlu0 %v336
        %v338 = vpop.xlane.xlu0 %337
        %v339 = vsub.f32 %v303, %v338
        %v340 = vmul.f32 %v339, 1.442695
        %v341 = vpow.pop %v340
        %343 = vrot.lane.b32.xlu0 %v341, 80
        %v344 = vpop.permute.xlu0 %343
        %v346 = vsel %vm320, %v344, 0.0
        %347 = vadd.xlane.f32.xlu0 %v346
        %v348 = vpop.xlane.xlu0 %347
        %v349 = vrcp.pop %v348
        %v350 = vmul.f32 %v341, %v349
        %v351 = vpack.c.bf16 %v350, %v350
        %v353 = vunpack.c.l.b16 %v351
        %v354 = vpack.c.b16 %v353, %v353
        %355 = vrot.lane.b32.xlu0 %v354, 96
        %v356 = vpop.permute.xlu0 %355
        %vm358 = vcmask 257152
        %359 = vst.msk [vmem:[%s221] sm:$0xf] %vm358, %v356
        %vm360 = vcmask 654848
        %v361 = vsel %vm360, %v303, -inf
        %362 = vmax.xlane.f32.xlu0 %v361
        %v363 = vpop.xlane.xlu0 %362
        %v364 = vsub.f32 %v303, %v363
        %v365 = vmul.f32 %v364, 1.442695
        %v366 = vpow.pop %v365
        %368 = vrot.lane.b32.xlu0 %v366, 64
        %v369 = vpop.permute.xlu0 %368
        %v371 = vsel %vm320, %v369, 0.0
        %372 = vadd.xlane.f32.xlu0 %v371
        %v373 = vpop.xlane.xlu0 %372
        %v374 = vrcp.pop %v373
        %v375 = vmul.f32 %v366, %v374
        %v376 = vpack.c.bf16 %v375, %v375
        %v378 = vunpack.c.l.b16 %v376
        %v379 = vpack.c.b16 %v378, %v378
        %380 = vrot.lane.b32.xlu0 %v379, 96
        %v381 = vpop.permute.xlu0 %380
        %vm383 = vcmask 388352
        %384 = vst.msk [vmem:[%s221] sm:$0xf] %vm383, %v381
        %vm385 = vcmask 786048
        %v386 = vsel %vm385, %v303, -inf
        %387 = vmax.xlane.f32.xlu0 %v386
        %v388 = vpop.xlane.xlu0 %387
        %v389 = vsub.f32 %v303, %v388
        %v390 = vmul.f32 %v389, 1.442695
        %v391 = vpow.pop %v390
        %393 = vrot.lane.b32.xlu0 %v391, 48
        %v394 = vpop.permute.xlu0 %393
        %v396 = vsel %vm320, %v394, 0.0
        %397 = vadd.xlane.f32.xlu0 %v396
        %v398 = vpop.xlane.xlu0 %397
        %v399 = vrcp.pop %v398
        %v400 = vmul.f32 %v391, %v399
        %v401 = vpack.c.bf16 %v400, %v400
        %v403 = vunpack.c.l.b16 %v401
        %v404 = vpack.c.b16 %v403, %v403
        %405 = vrot.lane.b32.xlu0 %v404, 96
        %v406 = vpop.permute.xlu0 %405
        %vm408 = vcmask 519552
        %409 = vst.msk [vmem:[%s221] sm:$0xf] %vm408, %v406
        %v410 = vld [vmem:[#allocation2] sm:$0x1]
        %vm411 = vcmask 1048320
        %v412 = vsel %vm411, %v303, -inf
        %v413 = vrot.slane %v412, 4
        %v414 = vmax.f32 %v412, %v413
        %v415 = vrot.slane %v414, 2
        %v416 = vmax.f32 %v414, %v415
        %v417 = vrot.slane %v416, 1
        %v418 = vmax.f32 %v416, %v417
        %v419 = vsel %vm264, %v305, -inf
        %v420 = vrot.slane %v419, 4
        %v421 = vmax.f32 %v419, %v420
        %v422 = vrot.slane %v421, 2
        %v423 = vmax.f32 %v421, %v422
        %v424 = vrot.slane %v423, 1
        %v425 = vmax.f32 %v423, %v424
        %v428 = vcombine.low %v418, %v425
        %v430 = vunpack.c.l.s4 1966171168
        %v431 = vunpack.c.0.s8 %v430
        %v432 = vlaneseq
        %v433 = vshrl.u32 %v432, 7
        %v434 = vsub.s32 %v431, %v433
        %v435 = vrot.slane %v428, %v434
        %v437 = vunpack.c.l.s4 1966171168
        %v438 = vunpack.c.0.s8 %v437
        %v439 = vlaneseq
        %v440 = vshrl.u32 %v439, 7
        %v441 = vsub.s32 %v438, %v440
        %v442 = vrot.slane %v435, %v441
        %443 = vrot.lane.b32.xlu0 %v442, 32
        %v444 = vpop.permute.xlu0 %443
        %v445 = vrot.slane %v444, 1
        %v446 = vsel %vm264, %v444, %v445
        %v448 = vmax.f32 %v410, %v446
        %v449 = vsub.f32 %v410, %v448
        %v450 = vmul.f32 %v449, 1.442695
        %v451 = vpow.pop %v450
        %v453 = vlaneseq
        %v454 = vshrl.u32 %v453, 7
        %v455 = vsub.s32 0, %v454
        %v456 = vrot.slane %v448, %v455
        %457 = vrot.lane.b32.xlu0 %v456, 96
        %v458 = vpop.permute.xlu0 %457
        %v460 = vsub.f32 %v303, %v458
        %v461 = vsub.f32 %v305, %v458
        %v462 = vmul.f32 %v460, 1.442695
        %v463 = vpow.pop %v462
        %v464 = vmul.f32 %v461, 1.442695
        %v465 = vpow.pop %v464
        %v466 = vld [vmem:[#allocation3] sm:$0x1]
        %v467 = vmul.f32 %v451, %v466
        %v468 = vsel %vm411, %v463, 0.0
        %v469 = vrot.slane %v468, 4
        %v470 = vadd.f32 %v468, %v469
        %v471 = vrot.slane %v470, 2
        %v472 = vadd.f32 %v470, %v471
        %v473 = vrot.slane %v472, 1
        %v474 = vadd.f32 %v472, %v473
        %v475 = vsel %vm264, %v465, 0.0
        %v476 = vrot.slane %v475, 4
        %v477 = vadd.f32 %v475, %v476
        %v478 = vrot.slane %v477, 2
        %v479 = vadd.f32 %v477, %v478
        %v480 = vrot.slane %v479, 1
        %v481 = vadd.f32 %v479, %v480
        %v484 = vcombine.low %v474, %v481
        %v486 = vunpack.c.l.s4 1966171168
        %v487 = vunpack.c.0.s8 %v486
        %v488 = vlaneseq
        %v489 = vshrl.u32 %v488, 7
        %v490 = vsub.s32 %v487, %v489
        %v491 = vrot.slane %v484, %v490
        %v493 = vunpack.c.l.s4 1966171168
        %v494 = vunpack.c.0.s8 %v493
        %v495 = vlaneseq
        %v496 = vshrl.u32 %v495, 7
        %v497 = vsub.s32 %v494, %v496
        %v498 = vrot.slane %v491, %v497
        %499 = vrot.lane.b32.xlu0 %v498, 32
        %v500 = vpop.permute.xlu0 %499
        %v501 = vrot.slane %v500, 1
        %v502 = vsel %vm264, %v500, %v501
        %v504 = vadd.f32 %v467, %v502
        %vm505 = vcmask 516096
        %506 = vst.msk [vmem:[#allocation3] sm:$0x1] %vm505, %v504
        %507 = vst.msk [vmem:[#allocation2] sm:$0x1] %vm505, %v448
        %v508 = vld [vmem:[#allocation4] sm:$0xff]
        %v510 = vlaneseq
        %v511 = vshrl.u32 %v510, 7
        %v512 = vsub.s32 0, %v511
        %v513 = vrot.slane %v451, %v512
        %v515 = vmul.f32 %v508, %v513
        %vm516 = vcmask 523264
        %517 = vst.msk [vmem:[#allocation4] sm:$0xff] %vm516, %v515
        %v518 = vpack.c.bf16 %v463, %v463
        %v519 = vpack.c.bf16 %v465, %v465
        %v520 = vpack.c.bf16 %v303, %v303
        %521 = vxpose.xlu0.c.b16.start [1/8] %v520, 128
        %522 = vxpose.xlu0.c.b16.cont [2/8] 0, 128
        %523 = vxpose.xlu0.c.b16.cont [3/8] 0, 128
        %524 = vxpose.xlu0.c.b16.cont [4/8] 0, 128
        %525 = vxpose.xlu0.c.b16.cont [5/8] 0, 128
        %526 = vxpose.xlu0.c.b16.cont [6/8] 0, 128
        %527 = vxpose.xlu0.c.b16.cont [7/8] 0, 128
        %528 = vxpose.xlu0.c.b16.end [8/8] 0, 128
        %v529 = vpop.trf.xlu0
        %v530 = vpop.trf.xlu0
        %v531 = vpop.trf.xlu0
        %v532 = vpop.trf.xlu0
        %v533 = vpop.trf.xlu0
        %v534 = vpop.trf.xlu0
        %v535 = vpop.trf.xlu0
        %v536 = vpop.trf.xlu0
        %538 = vrot.lane.b32.xlu0 %v518, 32
        %v539 = vpop.permute.xlu0 %538
        %vm540 = vcmask 64512
        %v542 = vsel %vm540, %v529, 0
        %vm544 = vcmask 1043456
        %v546 = vsel %vm544, %v539, 0
        %548 = vmatprep.subr.bf16.mxu0 0
        %549 = vmatpush1.bf16.msra.mxu0 %v546
        %550 = vmatprep.subr.bf16.mxu0 0
        %551 = vmatpush1.bf16.msra.mxu0 0
        %552 = vmatprep.subr.bf16.mxu0 0
        %553 = vmatpush1.bf16.msra.mxu0 0
        %554 = vmatprep.subr.bf16.mxu0 0
        %555 = vmatpush1.bf16.msra.mxu0 0
        %556 = vmatprep.subr.bf16.mxu0 0
        %557 = vmatpush1.bf16.msra.mxu0 0
        %558 = vmatprep.subr.bf16.mxu0 0
        %559 = vmatpush1.bf16.msra.mxu0 0
        %560 = vmatprep.subr.bf16.mxu0 0
        %561 = vmatpush1.bf16.msra.mxu0 0
        %562 = vmatprep.subr.bf16.mxu0 0
        %563 = vmatpush1.bf16.msra.mxu0 0
        %564 = vmatprep.subr.bf16.mxu0 0
        %565 = vmatpush1.bf16.msra.mxu0 0
        %566 = vmatprep.subr.bf16.mxu0 0
        %567 = vmatpush1.bf16.msra.mxu0 0
        %568 = vmatprep.subr.bf16.mxu0 0
        %569 = vmatpush1.bf16.msra.mxu0 0
        %570 = vmatprep.subr.bf16.mxu0 0
        %571 = vmatpush1.bf16.msra.mxu0 0
        %572 = vmatprep.subr.bf16.mxu0 0
        %573 = vmatpush1.bf16.msra.mxu0 0
        %574 = vmatprep.subr.bf16.mxu0 0
        %575 = vmatpush1.bf16.msra.mxu0 0
        %576 = vmatprep.subr.bf16.mxu0 0
        %577 = vmatpush1.bf16.msra.mxu0 0
        %578 = vmatprep.subr.bf16.mxu0 0
        %579 = vmatpush1.bf16.msra.mxu0 0
        %580 = vmatprep.mubr.bf16.mxu0 0
        %581 = vmatmul.mubr.bf16.gmra.mrb[0].mxu0 %v542
        %v582 = vpop.f32.mrb[0].mxu0
        %v583 = vadd.f32 0.0, %v582
        %v584 = vpop.f32.mrb[0].mxu0
        %v585 = vpop.f32.mrb[0].mxu0
        %v586 = vpop.f32.mrb[0].mxu0
        %587 = vdwg.mxu0
        %v588 = vld [vmem:[#allocation4] sm:$0xff]
        %v589 = vadd.f32 %v588, %v583
        %590 = vst.msk [vmem:[#allocation4] sm:$0xff] %vm320, %v589
        %592 = vrot.lane.b32.xlu0 %v520, 120
        %v593 = vpop.permute.xlu0 %592
        %595 = vxpose.xlu0.c.b16.start [1/8] %v593, 128
        %596 = vxpose.xlu0.c.b16.cont [2/8] 0, 128
        %597 = vxpose.xlu0.c.b16.cont [3/8] 0, 128
        %598 = vxpose.xlu0.c.b16.cont [4/8] 0, 128
        %599 = vxpose.xlu0.c.b16.cont [5/8] 0, 128
        %600 = vxpose.xlu0.c.b16.cont [6/8] 0, 128
        %601 = vxpose.xlu0.c.b16.cont [7/8] 0, 128
        %602 = vxpose.xlu0.c.b16.end [8/8] 0, 128
        %v603 = vpop.trf.xlu0
        %v604 = vpop.trf.xlu0
        %v605 = vpop.trf.xlu0
        %v606 = vpop.trf.xlu0
        %v607 = vpop.trf.xlu0
        %v608 = vpop.trf.xlu0
        %v609 = vpop.trf.xlu0
        %v610 = vpop.trf.xlu0
        %611 = vrot.lane.b32.xlu0 %v518, 16
        %v612 = vpop.permute.xlu0 %611
        %v614 = vsel %vm540, %v603, 0
        %v617 = vsel %vm544, %v612, 0
        %619 = vmatprep.subr.bf16.mxu0 0
        %620 = vmatpush1.bf16.msra.mxu0 %v617
        %621 = vmatprep.subr.bf16.mxu0 0
        %622 = vmatpush1.bf16.msra.mxu0 0
        %623 = vmatprep.subr.bf16.mxu0 0
        %624 = vmatpush1.bf16.msra.mxu0 0
        %625 = vmatprep.subr.bf16.mxu0 0
        %626 = vmatpush1.bf16.msra.mxu0 0
        %627 = vmatprep.subr.bf16.mxu0 0
        %628 = vmatpush1.bf16.msra.mxu0 0
        %629 = vmatprep.subr.bf16.mxu0 0
        %630 = vmatpush1.bf16.msra.mxu0 0
        %631 = vmatprep.subr.bf16.mxu0 0
        %632 = vmatpush1.bf16.msra.mxu0 0
        %633 = vmatprep.subr.bf16.mxu0 0
        %634 = vmatpush1.bf16.msra.mxu0 0
        %635 = vmatprep.subr.bf16.mxu0 0
        %636 = vmatpush1.bf16.msra.mxu0 0
        %637 = vmatprep.subr.bf16.mxu0 0
        %638 = vmatpush1.bf16.msra.mxu0 0
        %639 = vmatprep.subr.bf16.mxu0 0
        %640 = vmatpush1.bf16.msra.mxu0 0
        %641 = vmatprep.subr.bf16.mxu0 0
        %642 = vmatpush1.bf16.msra.mxu0 0
        %643 = vmatprep.subr.bf16.mxu0 0
        %644 = vmatpush1.bf16.msra.mxu0 0
        %645 = vmatprep.subr.bf16.mxu0 0
        %646 = vmatpush1.bf16.msra.mxu0 0
        %647 = vmatprep.subr.bf16.mxu0 0
        %648 = vmatpush1.bf16.msra.mxu0 0
        %649 = vmatprep.subr.bf16.mxu0 0
        %650 = vmatpush1.bf16.msra.mxu0 0
        %651 = vmatprep.mubr.bf16.mxu0 0
        %652 = vmatmul.mubr.bf16.gmra.mrb[0].mxu0 %v614
        %v653 = vpop.f32.mrb[0].mxu0
        %v654 = vadd.f32 0.0, %v653
        %v655 = vpop.f32.mrb[0].mxu0
        %v656 = vpop.f32.mrb[0].mxu0
        %v657 = vpop.f32.mrb[0].mxu0
        %658 = vdwg.mxu0
        %v659 = vld [vmem:[#allocation4] sm:$0xff]
        %661 = vrot.lane.b32.xlu0 %v654, 16
        %v662 = vpop.permute.xlu0 %661
        %v664 = vadd.f32 %v659, %v662
        %vm665 = vcmask 261248
        %666 = vst.msk [vmem:[#allocation4] sm:$0xff] %vm665, %v664
        %667 = vrot.lane.b32.xlu0 %v520, 112
        %v668 = vpop.permute.xlu0 %667
        %670 = vxpose.xlu0.c.b16.start [1/8] %v668, 128
        %671 = vxpose.xlu0.c.b16.cont [2/8] 0, 128
        %672 = vxpose.xlu0.c.b16.cont [3/8] 0, 128
        %673 = vxpose.xlu0.c.b16.cont [4/8] 0, 128
        %674 = vxpose.xlu0.c.b16.cont [5/8] 0, 128
        %675 = vxpose.xlu0.c.b16.cont [6/8] 0, 128
        %676 = vxpose.xlu0.c.b16.cont [7/8] 0, 128
        %677 = vxpose.xlu0.c.b16.end [8/8] 0, 128
        %v678 = vpop.trf.xlu0
        %v679 = vpop.trf.xlu0
        %v680 = vpop.trf.xlu0
        %v681 = vpop.trf.xlu0
        %v682 = vpop.trf.xlu0
        %v683 = vpop.trf.xlu0
        %v684 = vpop.trf.xlu0
        %v685 = vpop.trf.xlu0
        %v687 = vsel %vm540, %v678, 0
        %v690 = vsel %vm544, %v519, 0
        %692 = vmatprep.subr.bf16.mxu0 0
        %693 = vmatpush1.bf16.msra.mxu0 %v690
        %694 = vmatprep.subr.bf16.mxu0 0
        %695 = vmatpush1.bf16.msra.mxu0 0
        %696 = vmatprep.subr.bf16.mxu0 0
        %697 = vmatpush1.bf16.msra.mxu0 0
        %698 = vmatprep.subr.bf16.mxu0 0
        %699 = vmatpush1.bf16.msra.mxu0 0
        %700 = vmatprep.subr.bf16.mxu0 0
        %701 = vmatpush1.bf16.msra.mxu0 0
        %702 = vmatprep.subr.bf16.mxu0 0
        %703 = vmatpush1.bf16.msra.mxu0 0
        %704 = vmatprep.subr.bf16.mxu0 0
        %705 = vmatpush1.bf16.msra.mxu0 0
        %706 = vmatprep.subr.bf16.mxu0 0
        %707 = vmatpush1.bf16.msra.mxu0 0
        %708 = vmatprep.subr.bf16.mxu0 0
        %709 = vmatpush1.bf16.msra.mxu0 0
        %710 = vmatprep.subr.bf16.mxu0 0
        %711 = vmatpush1.bf16.msra.mxu0 0
        %712 = vmatprep.subr.bf16.mxu0 0
        %713 = vmatpush1.bf16.msra.mxu0 0
        %714 = vmatprep.subr.bf16.mxu0 0
        %715 = vmatpush1.bf16.msra.mxu0 0
        %716 = vmatprep.subr.bf16.mxu0 0
        %717 = vmatpush1.bf16.msra.mxu0 0
        %718 = vmatprep.subr.bf16.mxu0 0
        %719 = vmatpush1.bf16.msra.mxu0 0
        %720 = vmatprep.subr.bf16.mxu0 0
        %721 = vmatpush1.bf16.msra.mxu0 0
        %722 = vmatprep.subr.bf16.mxu0 0
        %723 = vmatpush1.bf16.msra.mxu0 0
        %724 = vmatprep.mubr.bf16.mxu0 0
        %725 = vmatmul.mubr.bf16.gmra.mrb[0].mxu0 %v687
        %v726 = vpop.f32.mrb[0].mxu0
        %v727 = vadd.f32 0.0, %v726
        %v728 = vpop.f32.mrb[0].mxu0
        %v729 = vpop.f32.mrb[0].mxu0
        %v730 = vpop.f32.mrb[0].mxu0
        %731 = vdwg.mxu0
        %v732 = vld [vmem:[#allocation4] sm:$0xff]
        %734 = vrot.lane.b32.xlu0 %v727, 32
        %v735 = vpop.permute.xlu0 %734
        %v737 = vadd.f32 %v732, %v735
        %738 = vst.msk [vmem:[#allocation4] sm:$0xff] %vm309, %v737
        %739 = vrot.lane.b32.xlu0 %v520, 104
        %v740 = vpop.permute.xlu0 %739
        %742 = vxpose.xlu0.c.b16.start [1/8] %v740, 128
        %743 = vxpose.xlu0.c.b16.cont [2/8] 0, 128
        %744 = vxpose.xlu0.c.b16.cont [3/8] 0, 128
        %745 = vxpose.xlu0.c.b16.cont [4/8] 0, 128
        %746 = vxpose.xlu0.c.b16.cont [5/8] 0, 128
        %747 = vxpose.xlu0.c.b16.cont [6/8] 0, 128
        %748 = vxpose.xlu0.c.b16.cont [7/8] 0, 128
        %749 = vxpose.xlu0.c.b16.end [8/8] 0, 128
        %v750 = vpop.trf.xlu0
        %v751 = vpop.trf.xlu0
        %v752 = vpop.trf.xlu0
        %v753 = vpop.trf.xlu0
        %v754 = vpop.trf.xlu0
        %v755 = vpop.trf.xlu0
        %v756 = vpop.trf.xlu0
        %v757 = vpop.trf.xlu0
        %759 = vrot.lane.b32.xlu0 %v519, 112
        %v760 = vpop.permute.xlu0 %759
        %v762 = vsel %vm540, %v750, 0
        %v765 = vsel %vm544, %v760, 0
        %767 = vmatprep.subr.bf16.mxu0 0
        %768 = vmatpush1.bf16.msra.mxu0 %v765
        %769 = vmatprep.subr.bf16.mxu0 0
        %770 = vmatpush1.bf16.msra.mxu0 0
        %771 = vmatprep.subr.bf16.mxu0 0
        %772 = vmatpush1.bf16.msra.mxu0 0
        %773 = vmatprep.subr.bf16.mxu0 0
        %774 = vmatpush1.bf16.msra.mxu0 0
        %775 = vmatprep.subr.bf16.mxu0 0
        %776 = vmatpush1.bf16.msra.mxu0 0
        %777 = vmatprep.subr.bf16.mxu0 0
        %778 = vmatpush1.bf16.msra.mxu0 0
        %779 = vmatprep.subr.bf16.mxu0 0
        %780 = vmatpush1.bf16.msra.mxu0 0
        %781 = vmatprep.subr.bf16.mxu0 0
        %782 = vmatpush1.bf16.msra.mxu0 0
        %783 = vmatprep.subr.bf16.mxu0 0
        %784 = vmatpush1.bf16.msra.mxu0 0
        %785 = vmatprep.subr.bf16.mxu0 0
        %786 = vmatpush1.bf16.msra.mxu0 0
        %787 = vmatprep.subr.bf16.mxu0 0
        %788 = vmatpush1.bf16.msra.mxu0 0
        %789 = vmatprep.subr.bf16.mxu0 0
        %790 = vmatpush1.bf16.msra.mxu0 0
        %791 = vmatprep.subr.bf16.mxu0 0
        %792 = vmatpush1.bf16.msra.mxu0 0
        %793 = vmatprep.subr.bf16.mxu0 0
        %794 = vmatpush1.bf16.msra.mxu0 0
        %795 = vmatprep.subr.bf16.mxu0 0
        %796 = vmatpush1.bf16.msra.mxu0 0
        %797 = vmatprep.subr.bf16.mxu0 0
        %798 = vmatpush1.bf16.msra.mxu0 0
        %799 = vmatprep.mubr.bf16.mxu0 0
        %800 = vmatmul.mubr.bf16.gmra.mrb[0].mxu0 %v762
        %v801 = vpop.f32.mrb[0].mxu0
        %v802 = vadd.f32 0.0, %v801
        %v803 = vpop.f32.mrb[0].mxu0
        %v804 = vpop.f32.mrb[0].mxu0
        %v805 = vpop.f32.mrb[0].mxu0
        %806 = vdwg.mxu0
        %v807 = vld [vmem:[#allocation4] sm:$0xff]
        %809 = vrot.lane.b32.xlu0 %v802, 48
        %v810 = vpop.permute.xlu0 %809
        %v812 = vadd.f32 %v807, %v810
        %813 = vst.msk [vmem:[#allocation4] sm:$0xff] %vm335, %v812
        // Predicated region
        $region41: #{tpu_custom_call.1} parent=27 // pred_check
          %p814 = pneg %p230
        $region42: #{tpu_custom_call.1} parent=27 // pred_check_branch
          %816 = sbr.rel (%p814) target = $region44
        $region43: #{tpu_custom_call.1} parent=27 // pred_region
          %v817 = vld [vmem:[#allocation4] sm:$0xff]
          %v818 = vld [vmem:[#allocation3] sm:$0x1]
          %v820 = vlaneseq
          %v821 = vshrl.u32 %v820, 7
          %v822 = vsub.s32 0, %v821
          %v823 = vrot.slane %v818, %v822
          %v825 = vrcp.pop %v823
          %v826 = vmul.f32 %v817, %v825
          %827 = vst.msk [vmem:[%s228] sm:$0xff] %vm516, %v826
        $region44: #{tpu_custom_call.1} parent=27 // pred_fallthru
          _
        %s828 = sand.u32 %s96, 1
        %s829 = scalar_lea.sflag [#allocation7], %s828
        %s830 = sand.u32 %s96, 1
        %s831 = smul.addr %s830, 4
        %s832 = scalar_lea.vmem [#allocation10], %s831
        %s833 = sand.u32 %s122, 1
        %s834 = scalar_lea.sflag [#allocation12], %s833
        %s835 = sand.u32 %s122, 1
        %s836 = smul.addr %s835, 8
        %s837 = scalar_lea.vmem [#allocation11], %s836
        // Predicated region
        $region45: #{tpu_custom_call.1} parent=27 // pred_check
          %p838 = pneg %p106
        $region46: #{tpu_custom_call.1} parent=27 // pred_check_branch
          %840 = sbr.rel (%p838) target = $region48
        $region47: #{tpu_custom_call.1} parent=27 // pred_region
          %s842 = ssub.s32 64, 64
          %843 = vsyncadd %s829, %s842
          %s844 = sadd.s32 %s30, %s29
          %s845 = smul.addr %s844, 64
          %s846 = scalar_lea.hbm %s2, %s845
          %s848 = sshll.u32 %s832, 4
          %s849 = int_to_ptr.vmem [resolvable:$true] %s848
          %851 = dma.vmem_to_hbm [thread:$0]  %s849, 64, %s846, %s829
        $region48: #{tpu_custom_call.1} parent=27 // pred_fallthru
          _
        // Predicated region
        $region49: #{tpu_custom_call.1} parent=27 // pred_check
          %p852 = pneg %p132
        $region50: #{tpu_custom_call.1} parent=27 // pred_check_branch
          %854 = sbr.rel (%p852) target = $region52
        $region51: #{tpu_custom_call.1} parent=27 // pred_region
          %s856 = ssub.s32 128, 128
          %857 = vsyncadd %s834, %s856
          %s858 = smul.addr %s29, 128
          %s859 = scalar_lea.hbm %s3, %s858
          %s861 = sshll.u32 %s837, 4
          %s862 = int_to_ptr.vmem [resolvable:$true] %s861
          %864 = dma.vmem_to_hbm [thread:$0]  %s862, 128, %s859, %s834
        $region52: #{tpu_custom_call.1} parent=27 // pred_fallthru
          _
      $region28: #{tpu_custom_call.1} parent=5 // pred_fallthru
        _
      %p865 = scmp.le.s32.totalorder 2, %s20
      // Predicated region
      $region53: #{tpu_custom_call.1} parent=5 // pred_check
        %p866 = pneg %p865
      $region54: #{tpu_custom_call.1} parent=5 // pred_check_branch
        %868 = sbr.rel (%p866) target = $region56
      $region55: #{tpu_custom_call.1} parent=5 // pred_region
        %s869 = ssub.s32 %s20, 2
        // Predicated region
        $region57: #{tpu_custom_call.1} parent=55 // pred_check
          %p870 = pneg %p112
        $region58: #{tpu_custom_call.1} parent=55 // pred_check_branch
          %872 = sbr.rel (%p870) target = $region60
        $region59: #{tpu_custom_call.1} parent=55 // pred_region
          %s873 = sand.u32 %s97, 1
          %s874 = scalar_lea.sflag [#allocation7], %s873
          %s875 = sand.u32 %s97, 1
          %s876 = smul.addr %s875, 4
          %s877 = scalar_lea.vmem [#allocation10], %s876
          %878 = dma.done %s874, 64
        $region60: #{tpu_custom_call.1} parent=55 // pred_fallthru
          _
        // Predicated region
        $region61: #{tpu_custom_call.1} parent=55 // pred_check
          %p879 = pneg %p138
        $region62: #{tpu_custom_call.1} parent=55 // pred_check_branch
          %881 = sbr.rel (%p879) target = $region64
        $region63: #{tpu_custom_call.1} parent=55 // pred_region
          %s882 = sand.u32 %s123, 1
          %s883 = scalar_lea.sflag [#allocation12], %s882
          %s884 = sand.u32 %s123, 1
          %s885 = smul.addr %s884, 8
          %s886 = scalar_lea.vmem [#allocation11], %s885
          %887 = dma.done %s883, 128
        $region64: #{tpu_custom_call.1} parent=55 // pred_fallthru
          _
      $region56: #{tpu_custom_call.1} parent=5 // pred_fallthru
        _
    $region6: #{tpu_custom_call.1} parent=1 // loop_footer
      %s24 = sadd.s32 1, %s20
    $region7: #{tpu_custom_call.1} parent=1 // loop_footer_branch
      %19 = sbr.rel target = $region3
    $region8: #{tpu_custom_call.1} parent=1 // loop_exit
      _
    %888 = vsyncpa [#allocation6], 1
    %s889 = scalar_lea.sflag [#allocation6], 1
    %890 = vsyncpa %s889, 1
    %891 = vsyncpa [#allocation9], 1
    %892 = vsyncpa [#allocation7], 1
    %s893 = scalar_lea.sflag [#allocation7], 1
    %894 = vsyncpa %s893, 1
    %895 = vsyncpa [#allocation12], 1
    %s896 = scalar_lea.sflag [#allocation12], 1
    %897 = vsyncpa %s896, 1

</llo_original>
